<compile_context>
chip_gen: v7x
topology: tpu7x:2x2x1
jax: 0.10.0
libtpu: 0.0.40
codegen_flags: <defaults>
</compile_context>

<pallas_src>
import functools
import math

import jax
import jax.numpy as jnp
from jax import lax
from jax.experimental import pallas as pl
from jax.experimental.pallas import tpu as pltpu

EPS = 1e-5  # nn.LayerNorm default


# --------------------------------------------------------------------------
# Per-generation budgeting / tiling helpers
# --------------------------------------------------------------------------

def _hw_budget():
    """(vmem_limit_bytes, preferred_row_tile) chosen from the chip's VMEM size."""
    try:
        cap = int(pltpu.get_tpu_info().vmem_capacity_bytes)
    except Exception:  # conservative fallback (v7x-sized)
        cap = 64 * 1024 * 1024
    vmem_limit = min(cap * 3 // 4, 100 * 1024 * 1024)   # ~48 MiB on v7x, ~96-100 MiB on v5e/v6e
    row_tile = 512 if cap >= 100 * 1024 * 1024 else 256
    return vmem_limit, row_tile


def _pad_rows(n, row_tile):
    """Pad a row count to an (8,128)-legal size; return (padded_n, tile)."""
    if n <= row_tile:
        np_ = max(8, ((n + 7) // 8) * 8)
        return np_, np_
    np_ = ((n + row_tile - 1) // row_tile) * row_tile
    return np_, row_tile


def _pf_tile(P):
    if P <= 2048:
        return P
    for t in (1024, 512, 256):
        if P % t == 0:
            return t
    return P  # TODO(synk): pad pf_dim to a 128-multiple for odd, very large sizes


def _layernorm_f32(y, g, b, eps):
    mean = jnp.mean(y, axis=-1, keepdims=True)
    d = y - mean
    var = jnp.mean(d * d, axis=-1, keepdims=True)   # biased, like nn.LayerNorm
    return d * lax.rsqrt(var + eps) * g + b


# --------------------------------------------------------------------------
# Kernel A: embedding combine  (tok*sqrt(H) + pos), bf16 in / f32 math / bf16 out
# --------------------------------------------------------------------------

def _embed_kernel(tok_ref, pos_ref, o_ref, *, scale):
    tok = tok_ref[0].astype(jnp.float32)
    pos = pos_ref[...].astype(jnp.float32)
    o_ref[0] = (tok * scale + pos).astype(o_ref.dtype)


def embed_scale_add(tok, pos, scale, ts, vmem_limit):
    B, Sp, H = tok.shape
    return pl.pallas_call(
        functools.partial(_embed_kernel, scale=scale),
        grid=(B, Sp // ts),
        in_specs=[
            pl.BlockSpec((1, ts, H), lambda b, s: (b, s, 0)),
            pl.BlockSpec((ts, H), lambda b, s: (s, 0)),
        ],
        out_specs=pl.BlockSpec((1, ts, H), lambda b, s: (b, s, 0)),
        out_shape=jax.ShapeDtypeStruct((B, Sp, H), jnp.bfloat16),
        compiler_params=pltpu.CompilerParams(
            dimension_semantics=("parallel", "parallel"),
            vmem_limit_bytes=vmem_limit),
    )(tok, pos)


# --------------------------------------------------------------------------
# Kernel B: fused QKV projection, concat layout, one (ts,H)x(H,3H) matmul
#           (1/sqrt(hd) already folded into the Q columns at prep time)
# --------------------------------------------------------------------------

def _qkv_kernel(x_ref, w_ref, b_ref, q_ref, k_ref, v_ref, *, hid_dim):
    x = x_ref[0]                                                    # (ts, H) bf16
    y = jnp.dot(x, w_ref[...], preferred_element_type=jnp.float32) + b_ref[...]
    H = hid_dim
    q_ref[0] = y[:, :H].astype(q_ref.dtype)
    k_ref[0] = y[:, H:2 * H].astype(k_ref.dtype)
    v_ref[0] = y[:, 2 * H:].astype(v_ref.dtype)


def qkv_projection(x, wqkv, bqkv, ts, vmem_limit):
    B, Sp, H = x.shape
    row = pl.BlockSpec((1, ts, H), lambda b, s: (b, s, 0))
    out_sd = jax.ShapeDtypeStruct((B, Sp, H), x.dtype)
    return pl.pallas_call(
        functools.partial(_qkv_kernel, hid_dim=H),
        grid=(B, Sp // ts),
        in_specs=[
            row,
            pl.BlockSpec((H, 3 * H), lambda b, s: (0, 0)),
            pl.BlockSpec((1, 3 * H), lambda b, s: (0, 0)),
        ],
        out_specs=[row, row, row],
        out_shape=[out_sd, out_sd, out_sd],
        compiler_params=pltpu.CompilerParams(
            dimension_semantics=("parallel", "parallel"),
            vmem_limit_bytes=vmem_limit),
    )(x, wqkv, bqkv)


# --------------------------------------------------------------------------
# Kernel C: multi-head attention, K/V fully VMEM-resident, single softmax pass
#           heads indexed with static lane slices of the concat layout
# --------------------------------------------------------------------------

def _attention_kernel(q_ref, k_ref, v_ref, m_ref, o_ref, *, n_heads, head_dim):
    mask = m_ref[0]                                  # (1, Sp) additive mask, f32
    q = q_ref[0]                                     # (tq, H) bf16, scale pre-folded
    k = k_ref[0]                                     # (Sp, H) bf16 (resident across q tiles)
    v = v_ref[0]                                     # (Sp, H) bf16 (resident across q tiles)
    outs = []
    for h in range(n_heads):                         # static unroll; slices are free when hd%128==0
        sl = slice(h * head_dim, (h + 1) * head_dim)
        s = lax.dot_general(q[:, sl], k[:, sl], (((1,), (1,)), ((), ())),
                            preferred_element_type=jnp.float32)     # (tq, Sp)
        s = s + mask
        m = jnp.max(s, axis=-1, keepdims=True)
        p = jnp.exp(s - m)
        l = jnp.sum(p, axis=-1, keepdims=True)
        ctx = jnp.dot(p.astype(v.dtype), v[:, sl],
                      preferred_element_type=jnp.float32)           # (tq, hd)
        outs.append(ctx * pl.reciprocal(l, approx=True))
    # single lane-dense store of the full-H context block
    o_ref[0] = jnp.concatenate(outs, axis=-1).astype(o_ref.dtype)


def attention(q, k, v, mask_add, n_heads, tq, vmem_limit):
    B, Sp, H = q.shape
    hd = H // n_heads
    qo_spec = pl.BlockSpec((1, tq, H), lambda b, qi: (b, qi, 0))
    kv_spec = pl.BlockSpec((1, Sp, H), lambda b, qi: (b, 0, 0))      # constant across qi -> stays in VMEM
    return pl.pallas_call(
        functools.partial(_attention_kernel, n_heads=n_heads, head_dim=hd),
        grid=(B, Sp // tq),
        in_specs=[qo_spec, kv_spec, kv_spec,
                  pl.BlockSpec((1, 1, Sp), lambda b, qi: (b, 0, 0))],
        out_specs=qo_spec,
        out_shape=jax.ShapeDtypeStruct((B, Sp, H), q.dtype),
        compiler_params=pltpu.CompilerParams(
            dimension_semantics=("parallel", "parallel"),
            vmem_limit_bytes=vmem_limit),
    )(q, k, v, mask_add)


# --------------------------------------------------------------------------
# Kernel D: attention output projection + residual + LayerNorm (fused, single matmul)
# --------------------------------------------------------------------------

def _attn_out_kernel(ctx_ref, wo_ref, bo_ref, res_ref, g_ref, b_ref, o_ref, *, eps):
    y = jnp.dot(ctx_ref[0], wo_ref[...], preferred_element_type=jnp.float32)
    y = y + bo_ref[...] + res_ref[0].astype(jnp.float32)
    o_ref[0] = _layernorm_f32(y, g_ref[...], b_ref[...], eps).astype(o_ref.dtype)


def attn_out_residual_ln(ctx, wo, bo, residual, gamma, beta, ts, vmem_limit, eps=EPS):
    B, Sp, H = ctx.shape
    row = pl.BlockSpec((1, ts, H), lambda b, s: (b, s, 0))
    vec = pl.BlockSpec((1, H), lambda b, s: (0, 0))
    return pl.pallas_call(
        functools.partial(_attn_out_kernel, eps=eps),
        grid=(B, Sp // ts),
        in_specs=[row, pl.BlockSpec((H, H), lambda b, s: (0, 0)), vec, row, vec, vec],
        out_specs=row,
        out_shape=jax.ShapeDtypeStruct((B, Sp, H), residual.dtype),
        compiler_params=pltpu.CompilerParams(
            dimension_semantics=("parallel", "parallel"),
            vmem_limit_bytes=vmem_limit),
    )(ctx, wo, bo, residual, gamma, beta)


# --------------------------------------------------------------------------
# Kernel E: FFN  w1 + ReLU + w2 + residual + LayerNorm (fused)
#           pf dim tiled as the (last) reduction grid axis; tp == P when it fits
# --------------------------------------------------------------------------

def _ffn_kernel(x_ref, w1_ref, b1_ref, w2_ref, b2_ref, g_ref, b_ref, o_ref,
                acc_ref, *, eps):
    pi = pl.program_id(2)

    @pl.when(pi == 0)
    def _():
        acc_ref[...] = jnp.zeros_like(acc_ref)

    x = x_ref[0]                                                     # (ts, H) bf16
    h = jnp.dot(x, w1_ref[...], preferred_element_type=jnp.float32) + b1_ref[...]
    h = jnp.maximum(h, 0.0).astype(x.dtype)                          # ReLU -> bf16
    acc_ref[...] += jnp.dot(h, w2_ref[...], preferred_element_type=jnp.float32)

    @pl.when(pi == pl.num_programs(2) - 1)
    def _():
        y = acc_ref[...] + b2_ref[...] + x_ref[0].astype(jnp.float32)
        o_ref[0] = _layernorm_f32(y, g_ref[...], b_ref[...], eps).astype(o_ref.dtype)


def ffn_residual_ln(x, w1, b1, w2, b2, gamma, beta, ts, vmem_limit, eps=EPS):
    B, Sp, H = x.shape
    P = w1.shape[1]
    tp = _pf_tile(P)
    row = pl.BlockSpec((1, ts, H), lambda b, s, p: (b, s, 0))
    vec = pl.BlockSpec((1, H), lambda b, s, p: (0, 0))
    return pl.pallas_call(
        functools.partial(_ffn_kernel, eps=eps),
        grid=(B, Sp // ts, P // tp),
        in_specs=[
            row,
            pl.BlockSpec((H, tp), lambda b, s, p: (0, p)),
            pl.BlockSpec((1, tp), lambda b, s, p: (0, p)),
            pl.BlockSpec((tp, H), lambda b, s, p: (p, 0)),
            vec, vec, vec,
        ],
        out_specs=row,
        out_shape=jax.ShapeDtypeStruct((B, Sp, H), x.dtype),
        scratch_shapes=[pltpu.VMEM((ts, H), jnp.float32)],
        compiler_params=pltpu.CompilerParams(
            dimension_semantics=("parallel", "parallel", "arbitrary"),
            vmem_limit_bytes=vmem_limit),
    )(x, w1, b1, w2, b2, gamma, beta)


# --------------------------------------------------------------------------
# Parameters (PyTorch-like layout) + one-time prep + forward glue
# --------------------------------------------------------------------------

def init_params(key, vocab, hid_dim, n_layers, n_heads, pf_dim, max_length):
    def dense(k, shape):
        return jax.random.normal(k, shape, jnp.float32) * 0.02

    keys = jax.random.split(key, 2 + n_layers)
    params = {
        "tok_emb": dense(keys[0], (vocab, hid_dim)),
        "pos_emb": dense(keys[1], (max_length, hid_dim)),
        "hid_dim": hid_dim,
        "n_heads": n_heads,
        "layers": [],
    }
    for li in range(n_layers):
        lk = jax.random.split(keys[2 + li], 14)
        params["layers"].append({
            "wq": dense(lk[0], (hid_dim, hid_dim)), "bq": dense(lk[6], (hid_dim,)),
            "wk": dense(lk[1], (hid_dim, hid_dim)), "bk": dense(lk[7], (hid_dim,)),
            "wv": dense(lk[2], (hid_dim, hid_dim)), "bv": dense(lk[8], (hid_dim,)),
            "wo": dense(lk[3], (hid_dim, hid_dim)), "bo": dense(lk[9], (hid_dim,)),
            "ln1_g": 1.0 + dense(lk[10], (hid_dim,)), "ln1_b": dense(lk[11], (hid_dim,)),
            "w1": dense(lk[4], (hid_dim, pf_dim)), "b1": dense(lk[12], (pf_dim,)),
            "w2": dense(lk[5], (pf_dim, hid_dim)), "b2": dense(lk[13], (hid_dim,)),
            "ln2_g": 1.0 + dense(lk[10], (hid_dim,)) * 0.5,
            "ln2_b": dense(lk[11], (hid_dim,)) * 0.5,
        })
    return params


def prepare_params(params):
    """One-time weight re-layout (hoisted out of the forward pass):
    bf16 weights/embeddings, fused QKV weight (H,3H) with 1/sqrt(hd) folded into Q."""
    H = params["hid_dim"]
    nh = params["n_heads"]
    hd = H // nh
    inv_scale = 1.0 / math.sqrt(hd)
    bf = jnp.bfloat16
    prep = {
        "hid_dim": H,
        "n_heads": nh,
        "emb_scale": math.sqrt(H),
        "tok_emb": params["tok_emb"].astype(bf),
        "pos_emb": params["pos_emb"].astype(bf),
        "layers": [],
    }
    for lp in params["layers"]:
        wq = (lp["wq"] * inv_scale).astype(bf)
        wqkv = jnp.concatenate([wq, lp["wk"].astype(bf), lp["wv"].astype(bf)], axis=1)
        bqkv = jnp.concatenate([lp["bq"] * inv_scale, lp["bk"], lp["bv"]]
                               ).reshape(1, 3 * H).astype(jnp.float32)
        prep["layers"].append({
            "wqkv": wqkv, "bqkv": bqkv,
            "wo": lp["wo"].astype(bf), "bo": lp["bo"].reshape(1, H).astype(jnp.float32),
            "ln1_g": lp["ln1_g"].reshape(1, H), "ln1_b": lp["ln1_b"].reshape(1, H),
            "w1": lp["w1"].astype(bf), "b1": lp["b1"].reshape(1, -1).astype(jnp.float32),
            "w2": lp["w2"].astype(bf), "b2": lp["b2"].reshape(1, H).astype(jnp.float32),
            "ln2_g": lp["ln2_g"].reshape(1, H), "ln2_b": lp["ln2_b"].reshape(1, H),
        })
    return prep


def encoder_forward(src, src_mask, prep):
    B, S = src.shape
    H = prep["hid_dim"]
    nh = prep["n_heads"]
    vmem_limit, row_tile = _hw_budget()
    Sp, ts = _pad_rows(S, row_tile)

    # Embedding gather is glue (jnp.take on the bf16 table); scale+add in Pallas.
    tok = jnp.take(prep["tok_emb"], src, axis=0)            # (B, S, H) bf16
    pos = prep["pos_emb"][:S]                               # (S, H) bf16
    maskp = src_mask
    if Sp != S:                                             # wrapper-side pad + masked pad keys
        tok = jnp.pad(tok, ((0, 0), (0, Sp - S), (0, 0)))
        pos = jnp.pad(pos, ((0, Sp - S), (0, 0)))
        maskp = jnp.pad(src_mask, ((0, 0), (0, Sp - S)))
    x = embed_scale_add(tok, pos, prep["emb_scale"], ts, vmem_limit)
    # nn.Dropout -> identity (eval mode)

    mask_add = jnp.where(maskp, 0.0, -1e9).astype(jnp.float32).reshape(B, 1, Sp)

    for lp in prep["layers"]:
        q, k, v = qkv_projection(x, lp["wqkv"], lp["bqkv"], ts, vmem_limit)
        ctx = attention(q, k, v, mask_add, nh, ts, vmem_limit)
        x = attn_out_residual_ln(ctx, lp["wo"], lp["bo"], x,
                                 lp["ln1_g"], lp["ln1_b"], ts, vmem_limit)
        x = ffn_residual_ln(x, lp["w1"], lp["b1"], lp["w2"], lp["b2"],
                            lp["ln2_g"], lp["ln2_b"], ts, vmem_limit)
    return x[:, :S] if Sp != S else x


# --------------------------------------------------------------------------
# Pure-JAX reference (mirrors the bf16/f32 boundaries of the kernel path)
# --------------------------------------------------------------------------

def encoder_reference(src, src_mask, params):
    B, S = src.shape
    H = params["hid_dim"]
    nh = params["n_heads"]
    hd = H // nh
    inv_scale = 1.0 / math.sqrt(hd)
    bf = jnp.bfloat16

    tok = jnp.take(params["tok_emb"].astype(bf), src, axis=0).astype(jnp.float32)
    pos = params["pos_emb"].astype(bf)[:S].astype(jnp.float32)
    x = (tok * math.sqrt(H) + pos[None]).astype(bf)
    mask_add = jnp.where(src_mask, 0.0, -1e9).astype(jnp.float32)[:, None, None, :]

    def ln(y, g, b, eps=EPS):
        mean = jnp.mean(y, axis=-1, keepdims=True)
        d = y - mean
        var = jnp.mean(d * d, axis=-1, keepdims=True)
        return d * lax.rsqrt(var + eps) * g + b

    for lp in params["layers"]:
        xf = x
        wq = (lp["wq"] * inv_scale).astype(bf)
        q = (jnp.dot(xf, wq, preferred_element_type=jnp.float32)
             + lp["bq"] * inv_scale).astype(bf)
        k = (jnp.dot(xf, lp["wk"].astype(bf), preferred_element_type=jnp.float32)
             + lp["bk"]).astype(bf)
        v = (jnp.dot(xf, lp["wv"].astype(bf), preferred_element_type=jnp.float32)
             + lp["bv"]).astype(bf)

        def heads(t):
            return t.reshape(B, S, nh, hd).transpose(0, 2, 1, 3)

        qh, kh, vh = heads(q), heads(k), heads(v)
        s = jnp.einsum("bhqd,bhkd->bhqk", qh, kh,
                       preferred_element_type=jnp.float32) + mask_add
        m = jnp.max(s, axis=-1, keepdims=True)
        p = jnp.exp(s - m)
        l = jnp.sum(p, axis=-1, keepdims=True)
        ctx = jnp.einsum("bhqk,bhkd->bhqd", p.astype(bf), vh,
                         preferred_element_type=jnp.float32) / l
        ctx_cat = ctx.transpose(0, 2, 1, 3).reshape(B, S, H).astype(bf)

        attn_out = (jnp.dot(ctx_cat, lp["wo"].astype(bf),
                            preferred_element_type=jnp.float32)
                    + lp["bo"] + xf.astype(jnp.float32))
        x = ln(attn_out, lp["ln1_g"], lp["ln1_b"]).astype(bf)

        hmid = jnp.maximum(
            jnp.dot(x, lp["w1"].astype(bf), preferred_element_type=jnp.float32)
            + lp["b1"], 0.0).astype(bf)
        ff = (jnp.dot(hmid, lp["w2"].astype(bf), preferred_element_type=jnp.float32)
              + lp["b2"] + x.astype(jnp.float32))
        x = ln(ff, lp["ln2_g"], lp["ln2_b"]).astype(bf)
    return x.astype(jnp.float32)


# --------------------------------------------------------------------------

if __name__ == "__main__":
    B, S = 2, 8
    VOCAB, HID, N_LAYERS, N_HEADS, PF_DIM, MAX_LEN = 50, 32, 2, 4, 64, 500

    key = jax.random.PRNGKey(0)
    pkey, skey = jax.random.split(key)
    params = init_params(pkey, VOCAB, HID, N_LAYERS, N_HEADS, PF_DIM, MAX_LEN)
    prep = prepare_params(params)          # one-time weight relayout (hoisted out of forward)

    src = jax.random.randint(skey, (B, S), 1, VOCAB, dtype=jnp.int32)
    # introduce some padding tokens (id 0) and build src_mask = (src != 0)
    src = src.at[0, S - 2:].set(0)
    src = src.at[1, S - 1:].set(0)
    src_mask = (src != 0)

    out = jax.block_until_ready(encoder_forward(src, src_mask, prep))

    assert out.shape == (B, S, HID), out.shape
    out_f32 = out.astype(jnp.float32)
    assert bool(jnp.all(jnp.isfinite(out_f32)))

    ref = encoder_reference(src, src_mask, params)
    max_diff = float(jnp.max(jnp.abs(out_f32 - ref)))
    assert max_diff < 1e-1, f"max |pallas - ref| = {max_diff}"

    print("KERNEL_OK")
</pallas_src>

<mosaic_0001>
module attributes {stable_mosaic.version = 11 : i64} {
  func.func @_embed_kernel(%arg0: i32, %arg1: i32, %arg2: memref<1x8x32xbf16, #tpu.memory_space<vmem>>, %arg3: memref<8x32xbf16, #tpu.memory_space<vmem>>, %arg4: memref<1x8x32xbf16, #tpu.memory_space<vmem>>) attributes {dimension_semantics = [#tpu.dimension_semantics<parallel>, #tpu.dimension_semantics<parallel>], iteration_bounds = array<i64: 2, 1>, scalar_prefetch = 0 : i64, scratch_operands = 0 : i64, tpu.core_type = #tpu.core_type<tc>, window_params = [{transform_indices = @transform_0, window_bounds = array<i64: 1, 8, 32>}, {transform_indices = @transform_1, window_bounds = array<i64: 8, 32>}, {transform_indices = @transform_2, window_bounds = array<i64: 1, 8, 32>}]} {
    %c0 = arith.constant 0 : index
    %c0_0 = arith.constant 0 : index
    %c0_1 = arith.constant 0 : index
    %0 = vector.load %arg2[%c0, %c0_0, %c0_1] : memref<1x8x32xbf16, #tpu.memory_space<vmem>>, vector<1x8x32xbf16>
    %1 = vector.shape_cast %0 : vector<1x8x32xbf16> to vector<8x32xbf16>
    %2 = arith.extf %1 : vector<8x32xbf16> to vector<8x32xf32>
    %c0_2 = arith.constant 0 : index
    %c0_3 = arith.constant 0 : index
    %3 = vector.load %arg3[%c0_2, %c0_3] : memref<8x32xbf16, #tpu.memory_space<vmem>>, vector<8x32xbf16>
    %4 = arith.extf %3 : vector<8x32xbf16> to vector<8x32xf32>
    %cst = arith.constant 5.65685415 : f32
    %5 = vector.broadcast %cst : f32 to vector<8x32xf32>
    %6 = arith.mulf %2, %5 : vector<8x32xf32>
    %7 = arith.addf %6, %4 : vector<8x32xf32>
    %8 = arith.truncf %7 : vector<8x32xf32> to vector<8x32xbf16>
    %c0_4 = arith.constant 0 : index
    %c0_5 = arith.constant 0 : index
    %c0_6 = arith.constant 0 : index
    %9 = vector.load %arg4[%c0_4, %c0_5, %c0_6] : memref<1x8x32xbf16, #tpu.memory_space<vmem>>, vector<1x8x32xbf16>
    %10 = vector.shape_cast %9 : vector<1x8x32xbf16> to vector<8x32xbf16>
    %11 = vector.shape_cast %8 : vector<8x32xbf16> to vector<1x8x32xbf16>
    tpu.vector_store %arg4[%c0_4, %c0_5, %c0_6], %11 {strides = array<i32>} : memref<1x8x32xbf16, #tpu.memory_space<vmem>>, vector<1x8x32xbf16>,
    return
  }
  func.func @transform_0(%arg0: i32, %arg1: i32) -> (i32, i32, i32) {
    %c0_i32 = arith.constant 0 : i32
    %c0_i32_0 = arith.constant 0 : i32
    return %arg0, %arg1, %c0_i32 : i32, i32, i32
  }
  func.func @transform_1(%arg0: i32, %arg1: i32) -> (i32, i32) {
    %c0_i32 = arith.constant 0 : i32
    %c0_i32_0 = arith.constant 0 : i32
    return %arg1, %c0_i32 : i32, i32
  }
  func.func @transform_2(%arg0: i32, %arg1: i32) -> (i32, i32, i32) {
    %c0_i32 = arith.constant 0 : i32
    %c0_i32_0 = arith.constant 0 : i32
    return %arg0, %arg1, %c0_i32 : i32, i32, i32
  }
}

</mosaic_0001>

<llo_original>
// kernel: tpu_custom_call.1
$region0: #{tpu_custom_call.1}
  #allocation0 [shape = 'u32[]', space=smem, size = 0x4, offset = 0x4, fixed_abs, tag = 'smem constant byte address 0x4 - core index']
  #allocation1 [shape = 'u32[144,128]{1,0:T(1,128)}', space=vmem, size = 0x12000, scoped, tag = 'internal scratch']
  %s0 = inlined_call_operand.hbm [shape: bf16[2,8,32], index: 0, kind: input, shape index: {}]
  %s1 = inlined_call_operand.hbm [shape: bf16[8,32], index: 1, kind: input, shape index: {}]
  %s2 = inlined_call_operand.hbm [shape: bf16[2,8,32], index: 2, kind: output, shape index: {}]
  %s3 = sld [smem:[#allocation0]]
  $region49: #{tpu_custom_call.1} parent=0
    _
  %s5 = ssub.s32 1, %s3
  %s6 = scalar_select 0, %s5, %s3
  $region1: #{tpu_custom_call.1} parent=0
    #allocation2 [shape = 'u8[4096]{0}', space=vmem, size = 0x1000, scoped, tag = 'input window, operand 0']
    #allocation3 [shape = 's32[2]{0}', space=sflag, size = 0x8, scoped, tag = 'scoped memory for tpu_custom_call.1']
    #allocation4 [shape = 's32[2]{0}', space=sflag, size = 0x8, scoped, tag = 'scoped memory for tpu_custom_call.1']
    #allocation5 [shape = 'u8[2048]{0}', space=vmem, size = 0x800, scoped, tag = 'input window, operand 1, single buffered']
    #allocation6 [shape = 's32[1]{0}', space=sflag, size = 0x4, scoped, tag = 'scoped memory for tpu_custom_call.1']
    #allocation7 [shape = 'u8[4096]{0}', space=vmem, size = 0x1000, scoped, tag = 'output window, operand 0']
    %7 = vsyncpa [#allocation3], 0
    %s8 = scalar_lea.sflag [#allocation3], 1
    %9 = vsyncpa %s8, 0
    %10 = vsyncpa [#allocation6], 0
    %11 = vsyncpa [#allocation4], 0
    %s12 = scalar_lea.sflag [#allocation4], 1
    %13 = vsyncpa %s12, 0
    loop: start=0, step=1, limit=4
    $region2: #{tpu_custom_call.1} parent=1 // loop_pre_header
      _
    $region3: #{tpu_custom_call.1} parent=1 // loop_header
      %s15 = sphi 0, %s19
      %p16 = scmp.ge.s32.totalorder %s15, 4
      %s22 = sphi 0, %s34
      %s23 = sphi 0, %s30
      %s24 = sphi 0, %s22
      %s25 = sphi 0, %s23
      %s26 = sphi 0, %s24
      %s27 = sphi 0, %s25
      %s39 = sphi 0, %s41
      %s42 = sphi 0, %s39
      %s43 = sphi 0, %s42
      %s59 = sphi 0, %s43
      %s65 = sphi 0, %s67
      %s68 = sphi 0, %s65
      %s69 = sphi 0, %s68
      %s85 = sphi 0, %s69
      %s93 = sphi 0, %s95
      %s96 = sphi 0, %s93
      %s97 = sphi 0, %s96
      %s113 = sphi 0, %s97
    $region4: #{tpu_custom_call.1} parent=1 // loop_header_branch
      %18 = sbr.rel (%p16) target = $region8
    $region5: #{tpu_custom_call.1} parent=1 // loop_body
      %s20 = ssub.s32 %s15, 1
      %s21 = ssub.s32 %s15, 2
      %s28 = sadd.s32 1, %s23
      %p29 = scmp.ge.s32.totalorder %s28, 1
      %s30 = scalar_select %p29, 0, %s28
      %s31 = sadd.s32 1, %s22
      %s32 = scalar_select %p29, %s31, %s22
      %p33 = scmp.ge.s32.totalorder %s32, 2
      %s34 = scalar_select %p33, 0, %s32
      %s35 = ssub.s32 %s22, %s34
      %s36 = ssub.s32 %s23, %s30
      %s37 = sor.u32 %s35, %s36
      %p38 = scmp.eq.s32.totalorder %s37, 0
      %s40 = sadd.s32 %s39, 1
      %s41 = scalar_select %p38, %s39, %s40
      %p44 = pneg %p38
      %p45 = scmp.eq.s32.totalorder %s15, 1
      %p46 = por %p44, %p45
      %p47 = scmp.ne.s32.totalorder %s39, %s42
      %p48 = scmp.eq.s32.totalorder %s15, 0
      %p49 = por %p47, %p48
      %p50 = scmp.ne.s32.totalorder %s39, %s42
      %p51 = scmp.eq.s32.totalorder %s20, 1
      %p52 = por %p50, %p51
      %p53 = scmp.ne.s32.totalorder %s42, %s43
      %p54 = scmp.eq.s32.totalorder %s20, 0
      %p55 = por %p53, %p54
      %p56 = scmp.ne.s32.totalorder %s42, %s43
      %p57 = scmp.eq.s32.totalorder %s21, 1
      %p58 = por %p56, %p57
      %p60 = scmp.ne.s32.totalorder %s43, %s59
      %p61 = scmp.eq.s32.totalorder %s21, 0
      %p62 = por %p60, %p61
      %s63 = ssub.s32 %s23, %s30
      %p64 = scmp.eq.s32.totalorder %s63, 0
      %s66 = sadd.s32 %s65, 1
      %s67 = scalar_select %p64, %s65, %s66
      %p70 = pneg %p64
      %p71 = scmp.eq.s32.totalorder %s15, 1
      %p72 = por %p70, %p71
      %p73 = scmp.ne.s32.totalorder %s65, %s68
      %p74 = scmp.eq.s32.totalorder %s15, 0
      %p75 = por %p73, %p74
      %p76 = scmp.ne.s32.totalorder %s65, %s68
      %p77 = scmp.eq.s32.totalorder %s20, 1
      %p78 = por %p76, %p77
      %p79 = scmp.ne.s32.totalorder %s68, %s69
      %p80 = scmp.eq.s32.totalorder %s20, 0
      %p81 = por %p79, %p80
      %p82 = scmp.ne.s32.totalorder %s68, %s69
      %p83 = scmp.eq.s32.totalorder %s21, 1
      %p84 = por %p82, %p83
      %p86 = scmp.ne.s32.totalorder %s69, %s85
      %p87 = scmp.eq.s32.totalorder %s21, 0
      %p88 = por %p86, %p87
      %s89 = ssub.s32 %s22, %s34
      %s90 = ssub.s32 %s23, %s30
      %s91 = sor.u32 %s89, %s90
      %p92 = scmp.eq.s32.totalorder %s91, 0
      %s94 = sadd.s32 %s93, 1
      %s95 = scalar_select %p92, %s93, %s94
      %p98 = pneg %p92
      %p99 = scmp.eq.s32.totalorder %s15, 1
      %p100 = por %p98, %p99
      %p101 = scmp.ne.s32.totalorder %s93, %s96
      %p102 = scmp.eq.s32.totalorder %s15, 0
      %p103 = por %p101, %p102
      %p104 = scmp.ne.s32.totalorder %s93, %s96
      %p105 = scmp.eq.s32.totalorder %s20, 1
      %p106 = por %p104, %p105
      %p107 = scmp.ne.s32.totalorder %s96, %s97
      %p108 = scmp.eq.s32.totalorder %s20, 0
      %p109 = por %p107, %p108
      %p110 = scmp.ne.s32.totalorder %s96, %s97
      %p111 = scmp.eq.s32.totalorder %s21, 1
      %p112 = por %p110, %p111
      %p114 = scmp.ne.s32.totalorder %s97, %s113
      %p115 = scmp.eq.s32.totalorder %s21, 0
      %p116 = por %p114, %p115
      %p117 = scmp.le.s32.totalorder 1, %s15
      %p118 = scmp.lt.s32.totalorder %s15, 3
      %p119 = pnand %p117, %p118
      %p120 = pneg %p119
      // Predicated region
      $region9: #{tpu_custom_call.1} parent=5 // pred_check
        _
      $region10: #{tpu_custom_call.1} parent=5 // pred_check_branch
        %122 = sbr.rel (%p119) target = $region12
      $region11: #{tpu_custom_call.1} parent=5 // pred_region
        %s123 = ssub.s32 %s15, 1
        // Predicated region
        $region13: #{tpu_custom_call.1} parent=11 // pred_check
          %p124 = pneg %p81
        $region14: #{tpu_custom_call.1} parent=11 // pred_check_branch
          %126 = sbr.rel (%p124) target = $region16
        $region15: #{tpu_custom_call.1} parent=11 // pred_region
          %s128 = ssub.s32 64, 64
          %129 = vsyncadd [#allocation6], %s128
          %s130 = smul.addr %s25, 64
          %s131 = scalar_lea.hbm %s1, %s130
          %s133 = sshll.u32 [#allocation5], 4
          %s134 = int_to_ptr.vmem [resolvable:$true] %s133
          %136 = dma.hbm_to_vmem [thread:$0]  %s131, 64, %s134, [#allocation6]
        $region16: #{tpu_custom_call.1} parent=11 // pred_fallthru
          _
      $region12: #{tpu_custom_call.1} parent=5 // pred_fallthru
        _
      %p137 = scmp.lt.s32.totalorder %s15, 2
      // Predicated region
      $region17: #{tpu_custom_call.1} parent=5 // pred_check
        %p138 = pneg %p137
      $region18: #{tpu_custom_call.1} parent=5 // pred_check_branch
        %140 = sbr.rel (%p138) target = $region20
      $region19: #{tpu_custom_call.1} parent=5 // pred_region
        // Predicated region
        $region21: #{tpu_custom_call.1} parent=19 // pred_check
          %p141 = pneg %p49
        $region22: #{tpu_custom_call.1} parent=19 // pred_check_branch
          %143 = sbr.rel (%p141) target = $region24
        $region23: #{tpu_custom_call.1} parent=19 // pred_region
          %s144 = sand.u32 %s39, 1
          %s145 = scalar_lea.sflag [#allocation3], %s144
          %s146 = sand.u32 %s39, 1
          %s147 = smul.addr %s146, 4
          %s148 = scalar_lea.vmem [#allocation2], %s147
          %s150 = ssub.s32 64, 64
          %151 = vsyncadd %s145, %s150
          %s152 = sadd.s32 %s23, %s22
          %s153 = smul.addr %s152, 64
          %s154 = scalar_lea.hbm %s0, %s153
          %s156 = sshll.u32 %s148, 4
          %s157 = int_to_ptr.vmem [resolvable:$true] %s156
          %159 = dma.hbm_to_vmem [thread:$0]  %s154, 64, %s157, %s145
        $region24: #{tpu_custom_call.1} parent=19 // pred_fallthru
          _
      $region20: #{tpu_custom_call.1} parent=5 // pred_fallthru
        _
      %p160 = scmp.le.s32.totalorder 1, %s15
      %p161 = scmp.lt.s32.totalorder %s15, 3
      %p162 = pnand %p160, %p161
      %p163 = pneg %p162
      // Predicated region
      $region25: #{tpu_custom_call.1} parent=5 // pred_check
        _
      $region26: #{tpu_custom_call.1} parent=5 // pred_check_branch
        %165 = sbr.rel (%p162) target = $region28
      $region27: #{tpu_custom_call.1} parent=5 // pred_region
        %s166 = ssub.s32 %s15, 1
        %s167 = sand.u32 %s42, 1
        %s168 = scalar_lea.sflag [#allocation3], %s167
        %s169 = sand.u32 %s42, 1
        %s170 = smul.addr %s169, 4
        %s171 = scalar_lea.vmem [#allocation2], %s170
        // Predicated region
        $region29: #{tpu_custom_call.1} parent=27 // pred_check
          %p172 = pneg %p55
        $region30: #{tpu_custom_call.1} parent=27 // pred_check_branch
          %174 = sbr.rel (%p172) target = $region32
        $region31: #{tpu_custom_call.1} parent=27 // pred_region
          %175 = dma.done %s168, 64
        $region32: #{tpu_custom_call.1} parent=27 // pred_fallthru
          _
        // Predicated region
        $region33: #{tpu_custom_call.1} parent=27 // pred_check
          %p176 = pneg %p81
        $region34: #{tpu_custom_call.1} parent=27 // pred_check_branch
          %178 = sbr.rel (%p176) target = $region36
        $region35: #{tpu_custom_call.1} parent=27 // pred_region
          %179 = dma.done [#allocation6], 64
        $region36: #{tpu_custom_call.1} parent=27 // pred_fallthru
          _
        %s180 = sand.u32 %s42, 1
        %s181 = scalar_lea.sflag [#allocation3], %s180
        %s182 = sand.u32 %s42, 1
        %s183 = smul.addr %s182, 4
        %s184 = scalar_lea.vmem [#allocation2], %s183
        %p185 = pneg %p55
        %p186 = pneg %p52
        %p187 = pneg %p81
        %p188 = pneg %p78
        %p189 = pneg %p109
        %p190 = pneg %p106
        %s191 = sand.u32 %s96, 1
        %s192 = scalar_lea.sflag [#allocation4], %s191
        %s193 = sand.u32 %s96, 1
        %s194 = smul.addr %s193, 4
        %s195 = scalar_lea.vmem [#allocation7], %s194
        %v196 = vld [vmem:[%s171] sm:$0xf]
        %v197 = vunpack.c.l.bf16 %v196
        %v198 = vld [vmem:[#allocation5] sm:$0xf]
        %v199 = vunpack.c.l.bf16 %v198
        %v200 = vmul.f32 %v197, 5.656854
        %v201 = vadd.f32 %v200, %v199
        %v202 = vpack.c.bf16 %v201, %v201
        %vm203 = vcmask 257024
        %204 = vst.msk [vmem:[%s195] sm:$0xf] %vm203, %v202
        %s205 = sand.u32 %s96, 1
        %s206 = scalar_lea.sflag [#allocation4], %s205
        %s207 = sand.u32 %s96, 1
        %s208 = smul.addr %s207, 4
        %s209 = scalar_lea.vmem [#allocation7], %s208
        // Predicated region
        $region37: #{tpu_custom_call.1} parent=27 // pred_check
          %p210 = pneg %p106
        $region38: #{tpu_custom_call.1} parent=27 // pred_check_branch
          %212 = sbr.rel (%p210) target = $region40
        $region39: #{tpu_custom_call.1} parent=27 // pred_region
          %s214 = ssub.s32 64, 64
          %215 = vsyncadd %s206, %s214
          %s216 = sadd.s32 %s25, %s24
          %s217 = smul.addr %s216, 64
          %s218 = scalar_lea.hbm %s2, %s217
          %s220 = sshll.u32 %s209, 4
          %s221 = int_to_ptr.vmem [resolvable:$true] %s220
          %223 = dma.vmem_to_hbm [thread:$0]  %s221, 64, %s218, %s206
        $region40: #{tpu_custom_call.1} parent=27 // pred_fallthru
          _
      $region28: #{tpu_custom_call.1} parent=5 // pred_fallthru
        _
      %p224 = scmp.le.s32.totalorder 2, %s15
      // Predicated region
      $region41: #{tpu_custom_call.1} parent=5 // pred_check
        %p225 = pneg %p224
      $region42: #{tpu_custom_call.1} parent=5 // pred_check_branch
        %227 = sbr.rel (%p225) target = $region44
      $region43: #{tpu_custom_call.1} parent=5 // pred_region
        %s228 = ssub.s32 %s15, 2
        // Predicated region
        $region45: #{tpu_custom_call.1} parent=43 // pred_check
          %p229 = pneg %p112
        $region46: #{tpu_custom_call.1} parent=43 // pred_check_branch
          %231 = sbr.rel (%p229) target = $region48
        $region47: #{tpu_custom_call.1} parent=43 // pred_region
          %s232 = sand.u32 %s97, 1
          %s233 = scalar_lea.sflag [#allocation4], %s232
          %s234 = sand.u32 %s97, 1
          %s235 = smul.addr %s234, 4
          %s236 = scalar_lea.vmem [#allocation7], %s235
          %237 = dma.done %s233, 64
        $region48: #{tpu_custom_call.1} parent=43 // pred_fallthru
          _
      $region44: #{tpu_custom_call.1} parent=5 // pred_fallthru
        _
    $region6: #{tpu_custom_call.1} parent=1 // loop_footer
      %s19 = sadd.s32 1, %s15
    $region7: #{tpu_custom_call.1} parent=1 // loop_footer_branch
      %14 = sbr.rel target = $region3
    $region8: #{tpu_custom_call.1} parent=1 // loop_exit
      _
    %238 = vsyncpa [#allocation3], 1
    %s239 = scalar_lea.sflag [#allocation3], 1
    %240 = vsyncpa %s239, 1
    %241 = vsyncpa [#allocation6], 1
    %242 = vsyncpa [#allocation4], 1
    %s243 = scalar_lea.sflag [#allocation4], 1
    %244 = vsyncpa %s243, 1

</llo_original>
